<compile_context>
chip_gen: v6e
topology: v6e:2x2x1
jax: 0.10.0
libtpu: 0.0.40
codegen_flags: <defaults>
</compile_context>

<pallas_src>
import functools

import jax
import jax.numpy as jnp
from jax.experimental import pallas as pl
from jax.experimental.pallas import tpu as pltpu


def _round_up(n, m):
    return ((n + m - 1) // m) * m


def fcnet_kernel(x_ref, mask_ref, w1_ref, b1_ref, w2_ref, b2_ref, o_ref):
    # fc1 (bf16 MXU operands, fp32 accumulation) + bias + ReLU
    x = x_ref[...].astype(jnp.bfloat16)
    h = jnp.dot(x, w1_ref[...], preferred_element_type=jnp.float32) + b1_ref[...]
    h = jnp.maximum(h, 0.0)

    # Dropout(p=0.5), training mode: mask holds {0, 1/(1-p)} so it is one mul.
    h = h * mask_ref[...].astype(jnp.float32)

    # fc2 (bf16 MXU operands, fp32 accumulation) + bias.
    # Padded output columns carry a -1e30 bias -> exp()==0 below.
    logits = (
        jnp.dot(h.astype(jnp.bfloat16), w2_ref[...],
                preferred_element_type=jnp.float32)
        + b2_ref[...]
    )

    # LogSoftmax over dim=1 (features), fp32.
    m = jnp.max(logits, axis=-1, keepdims=True)
    shifted = logits - m
    lse = jnp.log(jnp.sum(jnp.exp(shifted), axis=-1, keepdims=True))
    o_ref[...] = (shifted - lse).astype(o_ref.dtype)


def fcnet_forward(x, w1, b1, w2, b2, dropout_key, *, p=0.5, max_batch_tile=512):
    """x: (B, I) f32; w1: (I, H); b1: (1, H); w2: (H, O); b2: (1, O)."""
    B, I = x.shape
    H = w1.shape[1]
    O = w2.shape[1]

    # Lane-dense padding of every feature dim to a multiple of 128.
    Ip, Hp, Op = _round_up(I, 128), _round_up(H, 128), _round_up(O, 128)

    # Batch tile: multiple of 8, as large as reasonable (sweepable).
    TB = min(max_batch_tile, _round_up(B, 8))
    Bp = _round_up(B, TB)

    # Zero-pad inputs/weights; padded hidden units stay exactly 0 through ReLU
    # and dropout; padded output logits are forced to -1e30 via the b2 padding
    # so they vanish in the softmax normalization.
    xp = jnp.zeros((Bp, Ip), jnp.float32).at[:B, :I].set(x)
    w1p = jnp.zeros((Ip, Hp), jnp.bfloat16).at[:I, :H].set(w1.astype(jnp.bfloat16))
    b1p = jnp.zeros((1, Hp), jnp.float32).at[:, :H].set(b1.reshape(1, H))
    w2p = jnp.zeros((Hp, Op), jnp.bfloat16).at[:H, :O].set(w2.astype(jnp.bfloat16))
    b2p = jnp.full((1, Op), -1e30, jnp.float32).at[:, :O].set(b2.reshape(1, O))

    # Inverted-dropout keep mask, generated host/XLA-side (pltpu.prng_* does not
    # lower in interpret/CPU mode). Values {0, 1/(1-p)} are exact in bf16.
    keep = jax.random.bernoulli(dropout_key, 1.0 - p, (Bp, Hp))
    mask = (keep.astype(jnp.float32) * (1.0 / (1.0 - p))).astype(jnp.bfloat16)

    grid = (Bp // TB,)

    out = pl.pallas_call(
        fcnet_kernel,
        out_shape=jax.ShapeDtypeStruct((Bp, Op), jnp.float32),
        grid=grid,
        in_specs=[
            pl.BlockSpec((TB, Ip), lambda i: (i, 0)),   # x tile
            pl.BlockSpec((TB, Hp), lambda i: (i, 0)),   # dropout mask tile
            pl.BlockSpec((Ip, Hp), lambda i: (0, 0)),   # w1 (resident)
            pl.BlockSpec((1, Hp), lambda i: (0, 0)),    # b1 (resident)
            pl.BlockSpec((Hp, Op), lambda i: (0, 0)),   # w2 (resident)
            pl.BlockSpec((1, Op), lambda i: (0, 0)),    # b2 (resident)
        ],
        out_specs=pl.BlockSpec((TB, Op), lambda i: (i, 0)),
        compiler_params=pltpu.CompilerParams(
            dimension_semantics=("parallel",),
            vmem_limit_bytes=32 * 1024 * 1024,
        ),
    )(xp, mask, w1p, b1p, w2p, b2p)

    return out[:B, :O]


def init_params(key, input_size, hidden_size, output_size):
    # PyTorch-style uniform init: U(-1/sqrt(fan_in), 1/sqrt(fan_in)).
    k1, k2, k3, k4 = jax.random.split(key, 4)
    bnd1 = 1.0 / (input_size ** 0.5)
    bnd2 = 1.0 / (hidden_size ** 0.5)
    w1 = jax.random.uniform(k1, (input_size, hidden_size), jnp.float32, -bnd1, bnd1)
    b1 = jax.random.uniform(k2, (1, hidden_size), jnp.float32, -bnd1, bnd1)
    w2 = jax.random.uniform(k3, (hidden_size, output_size), jnp.float32, -bnd2, bnd2)
    b2 = jax.random.uniform(k4, (1, output_size), jnp.float32, -bnd2, bnd2)
    return w1, b1, w2, b2


if __name__ == "__main__":
    input_size, hidden_size, output_size = 16, 32, 16
    batch = 8

    key = jax.random.PRNGKey(0)
    kx, kp, kd = jax.random.split(key, 3)
    x = jax.random.normal(kx, (batch, input_size), jnp.float32)
    w1, b1, w2, b2 = init_params(kp, input_size, hidden_size, output_size)

    out = fcnet_forward(x, w1, b1, w2, b2, kd)
    jax.block_until_ready(out)

    assert out.shape == (batch, output_size)
    # log-softmax rows must exponentiate-sum to ~1
    assert jnp.allclose(jnp.sum(jnp.exp(out), axis=1), 1.0, atol=1e-4)
    print("KERNEL_OK")
</pallas_src>

<mosaic_0001>
module attributes {stable_mosaic.version = 11 : i64} {
  func.func @fcnet_kernel(%arg0: i32, %arg1: memref<8x128xf32, #tpu.memory_space<vmem>>, %arg2: memref<8x128xbf16, #tpu.memory_space<vmem>>, %arg3: memref<128x128xbf16, #tpu.memory_space<vmem>>, %arg4: memref<1x128xf32, #tpu.memory_space<vmem>>, %arg5: memref<128x128xbf16, #tpu.memory_space<vmem>>, %arg6: memref<1x128xf32, #tpu.memory_space<vmem>>, %arg7: memref<8x128xf32, #tpu.memory_space<vmem>>) attributes {dimension_semantics = [#tpu.dimension_semantics<parallel>], iteration_bounds = array<i64: 1>, scalar_prefetch = 0 : i64, scratch_operands = 0 : i64, tpu.core_type = #tpu.core_type<tc>, window_params = [{transform_indices = @transform_0, window_bounds = array<i64: 8, 128>}, {transform_indices = @transform_1, window_bounds = array<i64: 8, 128>}, {pipeline_mode = #tpu.pipeline_mode<synchronous>, transform_indices = @transform_2, window_bounds = array<i64: 128, 128>}, {pipeline_mode = #tpu.pipeline_mode<synchronous>, transform_indices = @transform_3, window_bounds = array<i64: 1, 128>}, {pipeline_mode = #tpu.pipeline_mode<synchronous>, transform_indices = @transform_4, window_bounds = array<i64: 128, 128>}, {pipeline_mode = #tpu.pipeline_mode<synchronous>, transform_indices = @transform_5, window_bounds = array<i64: 1, 128>}, {transform_indices = @transform_6, window_bounds = array<i64: 8, 128>}]} {
    %c0 = arith.constant 0 : index
    %c0_0 = arith.constant 0 : index
    %0 = vector.load %arg1[%c0, %c0_0] : memref<8x128xf32, #tpu.memory_space<vmem>>, vector<8x128xf32>
    %1 = arith.truncf %0 : vector<8x128xf32> to vector<8x128xbf16>
    %c0_1 = arith.constant 0 : index
    %c0_2 = arith.constant 0 : index
    %2 = vector.load %arg3[%c0_1, %c0_2] : memref<128x128xbf16, #tpu.memory_space<vmem>>, vector<128x128xbf16>
    %cst = arith.constant dense<0.000000e+00> : vector<8x128xf32>
    %3 = tpu.matmul %1, %2, %cst {dimension_numbers = #tpu.dot_dimension_numbers<[1], [0], [0], [1], [0, 0, 1, 1], [], []>} : vector<8x128xbf16>, vector<128x128xbf16>, vector<8x128xf32> -> vector<8x128xf32>
    %c0_3 = arith.constant 0 : index
    %c0_4 = arith.constant 0 : index
    %4 = vector.load %arg4[%c0_3, %c0_4] : memref<1x128xf32, #tpu.memory_space<vmem>>, vector<1x128xf32>
    %5 = vector.broadcast %4 : vector<1x128xf32> to vector<8x128xf32>
    %6 = arith.addf %3, %5 : vector<8x128xf32>
    %cst_5 = arith.constant 0.000000e+00 : f32
    %7 = vector.broadcast %cst_5 : f32 to vector<8x128xf32>
    %8 = arith.maximumf %6, %7 : vector<8x128xf32>
    %c0_6 = arith.constant 0 : index
    %c0_7 = arith.constant 0 : index
    %9 = vector.load %arg2[%c0_6, %c0_7] : memref<8x128xbf16, #tpu.memory_space<vmem>>, vector<8x128xbf16>
    %10 = arith.extf %9 : vector<8x128xbf16> to vector<8x128xf32>
    %11 = arith.mulf %8, %10 : vector<8x128xf32>
    %12 = arith.truncf %11 : vector<8x128xf32> to vector<8x128xbf16>
    %c0_8 = arith.constant 0 : index
    %c0_9 = arith.constant 0 : index
    %13 = vector.load %arg5[%c0_8, %c0_9] : memref<128x128xbf16, #tpu.memory_space<vmem>>, vector<128x128xbf16>
    %cst_10 = arith.constant dense<0.000000e+00> : vector<8x128xf32>
    %14 = tpu.matmul %12, %13, %cst_10 {dimension_numbers = #tpu.dot_dimension_numbers<[1], [0], [0], [1], [0, 0, 1, 1], [], []>} : vector<8x128xbf16>, vector<128x128xbf16>, vector<8x128xf32> -> vector<8x128xf32>
    %c0_11 = arith.constant 0 : index
    %c0_12 = arith.constant 0 : index
    %15 = vector.load %arg6[%c0_11, %c0_12] : memref<1x128xf32, #tpu.memory_space<vmem>>, vector<1x128xf32>
    %16 = vector.broadcast %15 : vector<1x128xf32> to vector<8x128xf32>
    %17 = arith.addf %14, %16 : vector<8x128xf32>
    %cst_13 = arith.constant dense<0xFF800000> : vector<8xf32>
    %18 = vector.multi_reduction <maximumf>, %17, %cst_13 [1] : vector<8x128xf32> to vector<8xf32>
    %19 = vector.shape_cast %18 : vector<8xf32> to vector<8x1xf32>
    %20 = vector.broadcast %19 : vector<8x1xf32> to vector<8x128xf32>
    %21 = arith.subf %17, %20 : vector<8x128xf32>
    %22 = math.exp %21 : vector<8x128xf32>
    %cst_14 = arith.constant dense<0.000000e+00> : vector<8xf32>
    %23 = vector.multi_reduction <add>, %22, %cst_14 [1] : vector<8x128xf32> to vector<8xf32>
    %24 = vector.shape_cast %23 : vector<8xf32> to vector<8x1xf32>
    %25 = math.log %24 : vector<8x1xf32>
    %26 = vector.broadcast %25 : vector<8x1xf32> to vector<8x128xf32>
    %27 = arith.subf %21, %26 : vector<8x128xf32>
    %c0_15 = arith.constant 0 : index
    %c0_16 = arith.constant 0 : index
    %28 = vector.load %arg7[%c0_15, %c0_16] : memref<8x128xf32, #tpu.memory_space<vmem>>, vector<8x128xf32>
    tpu.vector_store %arg7[%c0_15, %c0_16], %27 {strides = array<i32>} : memref<8x128xf32, #tpu.memory_space<vmem>>, vector<8x128xf32>,
    return
  }
  func.func @transform_0(%arg0: i32) -> (i32, i32) {
    %c0_i32 = arith.constant 0 : i32
    %c0_i32_0 = arith.constant 0 : i32
    return %arg0, %c0_i32 : i32, i32
  }
  func.func @transform_1(%arg0: i32) -> (i32, i32) {
    %c0_i32 = arith.constant 0 : i32
    %c0_i32_0 = arith.constant 0 : i32
    return %arg0, %c0_i32 : i32, i32
  }
  func.func @transform_2(%arg0: i32) -> (i32, i32) {
    %c0_i32 = arith.constant 0 : i32
    %c0_i32_0 = arith.constant 0 : i32
    %c0_i32_1 = arith.constant 0 : i32
    return %c0_i32, %c0_i32_0 : i32, i32
  }
  func.func @transform_3(%arg0: i32) -> (i32, i32) {
    %c0_i32 = arith.constant 0 : i32
    %c0_i32_0 = arith.constant 0 : i32
    %c0_i32_1 = arith.constant 0 : i32
    return %c0_i32, %c0_i32_0 : i32, i32
  }
  func.func @transform_4(%arg0: i32) -> (i32, i32) {
    %c0_i32 = arith.constant 0 : i32
    %c0_i32_0 = arith.constant 0 : i32
    %c0_i32_1 = arith.constant 0 : i32
    return %c0_i32, %c0_i32_0 : i32, i32
  }
  func.func @transform_5(%arg0: i32) -> (i32, i32) {
    %c0_i32 = arith.constant 0 : i32
    %c0_i32_0 = arith.constant 0 : i32
    %c0_i32_1 = arith.constant 0 : i32
    return %c0_i32, %c0_i32_0 : i32, i32
  }
  func.func @transform_6(%arg0: i32) -> (i32, i32) {
    %c0_i32 = arith.constant 0 : i32
    %c0_i32_0 = arith.constant 0 : i32
    return %arg0, %c0_i32 : i32, i32
  }
}

</mosaic_0001>

<llo_original>
// kernel: tpu_custom_call.1
$region0: #{tpu_custom_call.1}
  #allocation0 [shape = 'u32[]', space=smem, size = 0x4, offset = 0x4, fixed_abs, tag = 'smem constant byte address 0x4 - core index']
  #allocation1 [shape = 'u32[144,128]{1,0:T(1,128)}', space=vmem, size = 0x12000, scoped, tag = 'internal scratch']
  %s0 = inlined_call_operand.hbm [shape: f32[8,128], index: 0, kind: input, shape index: {}]
  %s1 = inlined_call_operand.hbm [shape: bf16[8,128], index: 1, kind: input, shape index: {}]
  %s2 = inlined_call_operand.hbm [shape: bf16[128,128], index: 2, kind: input, shape index: {}]
  %s3 = inlined_call_operand.vmem [shape: f32[1,128], index: 3, kind: input, shape index: {}]
  %s4 = inlined_call_operand.hbm [shape: bf16[128,128], index: 4, kind: input, shape index: {}]
  %s5 = inlined_call_operand.vmem [shape: f32[1,128], index: 5, kind: input, shape index: {}]
  %s6 = inlined_call_operand.hbm [shape: f32[8,128], index: 6, kind: output, shape index: {}]
  %s7 = sld [smem:[#allocation0]]
  $region50: #{tpu_custom_call.1} parent=0
    _
  %s9 = ssub.s32 1, %s7
  %s10 = scalar_select 0, %s9, %s7
  $region1: #{tpu_custom_call.1} parent=0
    #allocation2 [shape = 'u8[4096]{0}', space=vmem, size = 0x1000, scoped, tag = 'input window, operand 0, single buffered']
    #allocation3 [shape = 's32[1]{0}', space=sflag, size = 0x4, scoped, tag = 'scoped memory for tpu_custom_call.1']
    #allocation4 [shape = 's32[1]{0}', space=sflag, size = 0x4, scoped, tag = 'scoped memory for tpu_custom_call.1']
    #allocation5 [shape = 'u8[2048]{0}', space=vmem, size = 0x800, scoped, tag = 'input window, operand 1, single buffered']
    #allocation6 [shape = 's32[1]{0}', space=sflag, size = 0x4, scoped, tag = 'scoped memory for tpu_custom_call.1']
    #allocation7 [shape = 'u8[32768]{0}', space=vmem, size = 0x8000, scoped, tag = 'input window, operand 2, single buffered']
    #allocation8 [shape = 'u8[32768]{0}', space=vmem, size = 0x8000, scoped, tag = 'input window, operand 4, single buffered']
    #allocation9 [shape = 's32[1]{0}', space=sflag, size = 0x4, scoped, tag = 'scoped memory for tpu_custom_call.1']
    #allocation10 [shape = 'u8[4096]{0}', space=vmem, size = 0x1000, scoped, tag = 'output window, operand 0, single buffered']
    %11 = vsyncpa [#allocation3], 0
    %12 = vsyncpa [#allocation6], 0
    %13 = vsyncpa [#allocation9], 0
    %14 = vsyncpa [#allocation4], 0
    // Predicated region
    $region2: #{tpu_custom_call.1} parent=1 // pred_check
      _
    $region3: #{tpu_custom_call.1} parent=1 // pred_check_branch
      %16 = sbr.rel (0) target = $region5
    $region4: #{tpu_custom_call.1} parent=1 // pred_region
      %s18 = ssub.s32 128, 128
      %19 = vsyncadd [#allocation3], %s18
      %s21 = sshll.u32 [#allocation2], 4
      %s22 = int_to_ptr.vmem [resolvable:$true] %s21
      %24 = dma.hbm_to_vmem [thread:$0]  %s0, 128, %s22, [#allocation3]
    $region5: #{tpu_custom_call.1} parent=1 // pred_fallthru
      _
    // Predicated region
    $region6: #{tpu_custom_call.1} parent=1 // pred_check
      _
    $region7: #{tpu_custom_call.1} parent=1 // pred_check_branch
      %26 = sbr.rel (0) target = $region9
    $region8: #{tpu_custom_call.1} parent=1 // pred_region
      %s28 = ssub.s32 64, 64
      %29 = vsyncadd [#allocation6], %s28
      %s31 = sshll.u32 [#allocation5], 4
      %s32 = int_to_ptr.vmem [resolvable:$true] %s31
      %34 = dma.hbm_to_vmem [thread:$0]  %s1, 64, %s32, [#allocation6]
    $region9: #{tpu_custom_call.1} parent=1 // pred_fallthru
      _
    // Predicated region
    $region10: #{tpu_custom_call.1} parent=1 // pred_check
      _
    $region11: #{tpu_custom_call.1} parent=1 // pred_check_branch
      %36 = sbr.rel (0) target = $region13
    $region12: #{tpu_custom_call.1} parent=1 // pred_region
      %s38 = ssub.s32 1024, 1024
      %39 = vsyncadd [#allocation6], %s38
      %s40 = sshll.u32 [#allocation7], 4
      %s41 = int_to_ptr.vmem [resolvable:$true] %s40
      %46 = dma.hbm_to_vmem [thread:$0]  %s2, 1024, %s41, [#allocation6], 64, 64, 4
    $region13: #{tpu_custom_call.1} parent=1 // pred_fallthru
      _
    // Predicated region
    $region14: #{tpu_custom_call.1} parent=1 // pred_check
      _
    $region15: #{tpu_custom_call.1} parent=1 // pred_check_branch
      %48 = sbr.rel (0) target = $region17
    $region16: #{tpu_custom_call.1} parent=1 // pred_region
      _
    $region17: #{tpu_custom_call.1} parent=1 // pred_fallthru
      _
    // Predicated region
    $region18: #{tpu_custom_call.1} parent=1 // pred_check
      _
    $region19: #{tpu_custom_call.1} parent=1 // pred_check_branch
      %50 = sbr.rel (0) target = $region21
    $region20: #{tpu_custom_call.1} parent=1 // pred_region
      %s52 = ssub.s32 1024, 1024
      %53 = vsyncadd [#allocation9], %s52
      %s54 = sshll.u32 [#allocation8], 4
      %s55 = int_to_ptr.vmem [resolvable:$true] %s54
      %60 = dma.hbm_to_vmem [thread:$0]  %s4, 1024, %s55, [#allocation9], 64, 64, 4
    $region21: #{tpu_custom_call.1} parent=1 // pred_fallthru
      _
    // Predicated region
    $region22: #{tpu_custom_call.1} parent=1 // pred_check
      _
    $region23: #{tpu_custom_call.1} parent=1 // pred_check_branch
      %62 = sbr.rel (0) target = $region25
    $region24: #{tpu_custom_call.1} parent=1 // pred_region
      _
    $region25: #{tpu_custom_call.1} parent=1 // pred_fallthru
      _
    // Predicated region
    $region26: #{tpu_custom_call.1} parent=1 // pred_check
      _
    $region27: #{tpu_custom_call.1} parent=1 // pred_check_branch
      %64 = sbr.rel (0) target = $region29
    $region28: #{tpu_custom_call.1} parent=1 // pred_region
      %65 = dma.done [#allocation3], 128
    $region29: #{tpu_custom_call.1} parent=1 // pred_fallthru
      _
    // Predicated region
    $region30: #{tpu_custom_call.1} parent=1 // pred_check
      _
    $region31: #{tpu_custom_call.1} parent=1 // pred_check_branch
      %67 = sbr.rel (0) target = $region33
    $region32: #{tpu_custom_call.1} parent=1 // pred_region
      %68 = dma.done [#allocation6], 64
    $region33: #{tpu_custom_call.1} parent=1 // pred_fallthru
      _
    // Predicated region
    $region34: #{tpu_custom_call.1} parent=1 // pred_check
      _
    $region35: #{tpu_custom_call.1} parent=1 // pred_check_branch
      %70 = sbr.rel (0) target = $region37
    $region36: #{tpu_custom_call.1} parent=1 // pred_region
      %71 = dma.done [#allocation6], 1024
    $region37: #{tpu_custom_call.1} parent=1 // pred_fallthru
      _
    // Predicated region
    $region38: #{tpu_custom_call.1} parent=1 // pred_check
      _
    $region39: #{tpu_custom_call.1} parent=1 // pred_check_branch
      %73 = sbr.rel (0) target = $region41
    $region40: #{tpu_custom_call.1} parent=1 // pred_region
      %74 = dma.done [#allocation9], 1024
    $region41: #{tpu_custom_call.1} parent=1 // pred_fallthru
      _
    %v76 = vld [vmem:[#allocation2] sm:$0xff]
    %v77 = vpack.c.bf16 %v76, %v76
    %v78 = vld [vmem:[#allocation7] sm:$0xf]
    %v79 = vld [vmem:[#allocation7 + $0x4] sm:$0xf]
    %v80 = vld [vmem:[#allocation7 + $0x8] sm:$0xf]
    %v81 = vld [vmem:[#allocation7 + $0xc] sm:$0xf]
    %v82 = vld [vmem:[#allocation7 + $0x10] sm:$0xf]
    %v83 = vld [vmem:[#allocation7 + $0x14] sm:$0xf]
    %v84 = vld [vmem:[#allocation7 + $0x18] sm:$0xf]
    %v85 = vld [vmem:[#allocation7 + $0x1c] sm:$0xf]
    %v86 = vld [vmem:[#allocation7 + $0x20] sm:$0xf]
    %v87 = vld [vmem:[#allocation7 + $0x24] sm:$0xf]
    %v88 = vld [vmem:[#allocation7 + $0x28] sm:$0xf]
    %v89 = vld [vmem:[#allocation7 + $0x2c] sm:$0xf]
    %v90 = vld [vmem:[#allocation7 + $0x30] sm:$0xf]
    %v91 = vld [vmem:[#allocation7 + $0x34] sm:$0xf]
    %v92 = vld [vmem:[#allocation7 + $0x38] sm:$0xf]
    %v93 = vld [vmem:[#allocation7 + $0x3c] sm:$0xf]
    %v94 = vld [vmem:[%s3] sm:$0x1]
    %v96 = vlaneseq
    %v97 = vshrl.u32 %v96, 7
    %v98 = vsub.s32 0, %v97
    %v99 = vrot.slane %v94, %v98
    %v117 = vunpack.c.l.b16 %v78
    %v118 = vunpack.c.l.b16 %v79
    %v119 = vunpack.c.l.b16 %v80
    %v120 = vunpack.c.l.b16 %v81
    %v121 = vunpack.c.l.b16 %v82
    %v122 = vunpack.c.l.b16 %v83
    %v123 = vunpack.c.l.b16 %v84
    %v124 = vunpack.c.l.b16 %v85
    %v125 = vunpack.c.l.b16 %v86
    %v126 = vunpack.c.l.b16 %v87
    %v127 = vunpack.c.l.b16 %v88
    %v128 = vunpack.c.l.b16 %v89
    %v129 = vunpack.c.l.b16 %v90
    %v130 = vunpack.c.l.b16 %v91
    %v131 = vunpack.c.l.b16 %v92
    %v132 = vunpack.c.l.b16 %v93
    %v133 = vpack.c.b16 %v118, %v117
    %v134 = vpack.c.b16 %v120, %v119
    %v135 = vpack.c.b16 %v122, %v121
    %v136 = vpack.c.b16 %v124, %v123
    %v137 = vpack.c.b16 %v126, %v125
    %v138 = vpack.c.b16 %v128, %v127
    %v139 = vpack.c.b16 %v130, %v129
    %v140 = vpack.c.b16 %v132, %v131
    %149 = vmatprep.subr.bf16.mxu0 0
    %150 = vmatpush1.bf16.msra.mxu0 %v140
    %151 = vmatprep.subr.bf16.mxu0 0
    %152 = vmatpush1.bf16.msra.mxu0 %v139
    %153 = vmatprep.subr.bf16.mxu0 0
    %154 = vmatpush1.bf16.msra.mxu0 %v138
    %155 = vmatprep.subr.bf16.mxu0 0
    %156 = vmatpush1.bf16.msra.mxu0 %v137
    %157 = vmatprep.subr.bf16.mxu0 0
    %158 = vmatpush1.bf16.msra.mxu0 %v136
    %159 = vmatprep.subr.bf16.mxu0 0
    %160 = vmatpush1.bf16.msra.mxu0 %v135
    %161 = vmatprep.subr.bf16.mxu0 0
    %162 = vmatpush1.bf16.msra.mxu0 %v134
    %163 = vmatprep.subr.bf16.mxu0 0
    %164 = vmatpush1.bf16.msra.mxu0 %v133
    %165 = vmatprep.subr.bf16.mxu0 0
    %166 = vmatpush2.bf16.msra.mxu0 0
    %167 = vmatprep.subr.bf16.mxu0 0
    %168 = vmatpush2.bf16.msra.mxu0 0
    %169 = vmatprep.subr.bf16.mxu0 0
    %170 = vmatpush2.bf16.msra.mxu0 0
    %171 = vmatprep.subr.bf16.mxu0 0
    %172 = vmatpush2.bf16.msra.mxu0 0
    %173 = vmatprep.subr.bf16.mxu0 0
    %174 = vmatpush2.bf16.msra.mxu0 0
    %175 = vmatprep.subr.bf16.mxu0 0
    %176 = vmatpush2.bf16.msra.mxu0 0
    %177 = vmatprep.subr.bf16.mxu0 0
    %178 = vmatpush2.bf16.msra.mxu0 0
    %179 = vmatprep.subr.bf16.mxu0 0
    %180 = vmatpush2.bf16.msra.mxu0 0
    %181 = vmatprep.mubr.bf16.mxu0 0
    %182 = vmatmul.mubr.bf16.gmra.mxu0 %v77
    %v183 = vpop.f32.mrf.mxu0
    %v184 = vadd.f32 %v99, %v183
    %v185 = vpop.f32.mrf.mxu0
    %v186 = vpop.f32.mrf.mxu0
    %v187 = vpop.f32.mrf.mxu0
    %188 = vdwg.mxu0
    %v189 = vmax.f32 %v184, 0.0
    %v190 = vld [vmem:[#allocation5] sm:$0xf]
    %v191 = vunpack.c.l.bf16 %v190
    %v192 = vmul.f32 %v189, %v191
    %v193 = vpack.c.bf16 %v192, %v192
    %v194 = vld [vmem:[#allocation8] sm:$0xf]
    %v195 = vld [vmem:[#allocation8 + $0x4] sm:$0xf]
    %v196 = vld [vmem:[#allocation8 + $0x8] sm:$0xf]
    %v197 = vld [vmem:[#allocation8 + $0xc] sm:$0xf]
    %v198 = vld [vmem:[#allocation8 + $0x10] sm:$0xf]
    %v199 = vld [vmem:[#allocation8 + $0x14] sm:$0xf]
    %v200 = vld [vmem:[#allocation8 + $0x18] sm:$0xf]
    %v201 = vld [vmem:[#allocation8 + $0x1c] sm:$0xf]
    %v202 = vld [vmem:[#allocation8 + $0x20] sm:$0xf]
    %v203 = vld [vmem:[#allocation8 + $0x24] sm:$0xf]
    %v204 = vld [vmem:[#allocation8 + $0x28] sm:$0xf]
    %v205 = vld [vmem:[#allocation8 + $0x2c] sm:$0xf]
    %v206 = vld [vmem:[#allocation8 + $0x30] sm:$0xf]
    %v207 = vld [vmem:[#allocation8 + $0x34] sm:$0xf]
    %v208 = vld [vmem:[#allocation8 + $0x38] sm:$0xf]
    %v209 = vld [vmem:[#allocation8 + $0x3c] sm:$0xf]
    %v210 = vld [vmem:[%s5] sm:$0x1]
    %v212 = vlaneseq
    %v213 = vshrl.u32 %v212, 7
    %v214 = vsub.s32 0, %v213
    %v215 = vrot.slane %v210, %v214
    %v233 = vunpack.c.l.b16 %v194
    %v234 = vunpack.c.l.b16 %v195
    %v235 = vunpack.c.l.b16 %v196
    %v236 = vunpack.c.l.b16 %v197
    %v237 = vunpack.c.l.b16 %v198
    %v238 = vunpack.c.l.b16 %v199
    %v239 = vunpack.c.l.b16 %v200
    %v240 = vunpack.c.l.b16 %v201
    %v241 = vunpack.c.l.b16 %v202
    %v242 = vunpack.c.l.b16 %v203
    %v243 = vunpack.c.l.b16 %v204
    %v244 = vunpack.c.l.b16 %v205
    %v245 = vunpack.c.l.b16 %v206
    %v246 = vunpack.c.l.b16 %v207
    %v247 = vunpack.c.l.b16 %v208
    %v248 = vunpack.c.l.b16 %v209
    %v249 = vpack.c.b16 %v234, %v233
    %v250 = vpack.c.b16 %v236, %v235
    %v251 = vpack.c.b16 %v238, %v237
    %v252 = vpack.c.b16 %v240, %v239
    %v253 = vpack.c.b16 %v242, %v241
    %v254 = vpack.c.b16 %v244, %v243
    %v255 = vpack.c.b16 %v246, %v245
    %v256 = vpack.c.b16 %v248, %v247
    %265 = vmatprep.subr.bf16.mxu0 0
    %266 = vmatpush1.bf16.msra.mxu0 %v256
    %267 = vmatprep.subr.bf16.mxu0 0
    %268 = vmatpush1.bf16.msra.mxu0 %v255
    %269 = vmatprep.subr.bf16.mxu0 0
    %270 = vmatpush1.bf16.msra.mxu0 %v254
    %271 = vmatprep.subr.bf16.mxu0 0
    %272 = vmatpush1.bf16.msra.mxu0 %v253
    %273 = vmatprep.subr.bf16.mxu0 0
    %274 = vmatpush1.bf16.msra.mxu0 %v252
    %275 = vmatprep.subr.bf16.mxu0 0
    %276 = vmatpush1.bf16.msra.mxu0 %v251
    %277 = vmatprep.subr.bf16.mxu0 0
    %278 = vmatpush1.bf16.msra.mxu0 %v250
    %279 = vmatprep.subr.bf16.mxu0 0
    %280 = vmatpush1.bf16.msra.mxu0 %v249
    %281 = vmatprep.subr.bf16.mxu0 0
    %282 = vmatpush2.bf16.msra.mxu0 0
    %283 = vmatprep.subr.bf16.mxu0 0
    %284 = vmatpush2.bf16.msra.mxu0 0
    %285 = vmatprep.subr.bf16.mxu0 0
    %286 = vmatpush2.bf16.msra.mxu0 0
    %287 = vmatprep.subr.bf16.mxu0 0
    %288 = vmatpush2.bf16.msra.mxu0 0
    %289 = vmatprep.subr.bf16.mxu0 0
    %290 = vmatpush2.bf16.msra.mxu0 0
    %291 = vmatprep.subr.bf16.mxu0 0
    %292 = vmatpush2.bf16.msra.mxu0 0
    %293 = vmatprep.subr.bf16.mxu0 0
    %294 = vmatpush2.bf16.msra.mxu0 0
    %295 = vmatprep.subr.bf16.mxu0 0
    %296 = vmatpush2.bf16.msra.mxu0 0
    %297 = vmatprep.mubr.bf16.mxu0 0
    %298 = vmatmul.mubr.bf16.gmra.mxu0 %v193
    %v299 = vpop.f32.mrf.mxu0
    %v300 = vadd.f32 %v215, %v299
    %v301 = vpop.f32.mrf.mxu0
    %v302 = vpop.f32.mrf.mxu0
    %v303 = vpop.f32.mrf.mxu0
    %304 = vdwg.mxu0
    %305 = vmax.xlane.f32.xlu0 %v300
    %v306 = vpop.xlane.xlu0 %305
    %v307 = vsub.f32 %v300, %v306
    %v308 = vmul.f32 %v307, 1.442695
    %v309 = vpow.pop %v308
    %310 = vadd.xlane.f32.xlu0 %v309
    %v311 = vpop.xlane.xlu0 %310
    %v312 = vlog2.pop %v311
    %v313 = vmul.f32 %v312, 0.6931472
    %v314 = vsub.f32 %v307, %v313
    %315 = vst [vmem:[#allocation10] sm:$0xff] %v314
    // Predicated region
    $region42: #{tpu_custom_call.1} parent=1 // pred_check
      _
    $region43: #{tpu_custom_call.1} parent=1 // pred_check_branch
      %317 = sbr.rel (0) target = $region45
    $region44: #{tpu_custom_call.1} parent=1 // pred_region
      %s319 = ssub.s32 128, 128
      %320 = vsyncadd [#allocation4], %s319
      %s322 = sshll.u32 [#allocation10], 4
      %s323 = int_to_ptr.vmem [resolvable:$true] %s322
      %325 = dma.vmem_to_hbm [thread:$0]  %s323, 128, %s6, [#allocation4]
    $region45: #{tpu_custom_call.1} parent=1 // pred_fallthru
      _
    // Predicated region
    $region46: #{tpu_custom_call.1} parent=1 // pred_check
      _
    $region47: #{tpu_custom_call.1} parent=1 // pred_check_branch
      %327 = sbr.rel (0) target = $region49
    $region48: #{tpu_custom_call.1} parent=1 // pred_region
      %328 = dma.done [#allocation4], 128
    $region49: #{tpu_custom_call.1} parent=1 // pred_fallthru
      _
    %329 = vsyncpa [#allocation3], 1
    %330 = vsyncpa [#allocation6], 1
    %331 = vsyncpa [#allocation9], 1
    %332 = vsyncpa [#allocation4], 1

</llo_original>
